<compile_context>
chip_gen: v5e
topology: v5e:2x2
jax: 0.10.0
libtpu: 0.0.40
codegen_flags: <defaults>
</compile_context>

<pallas_src>
import functools
import math

import jax
import jax.numpy as jnp
from jax.experimental import pallas as pl
from jax.experimental.pallas import tpu as pltpu


LANE = 128      # pad the feature (last) dim to a multiple of this -> lane-dense tiles
SUBLANE = 16    # bf16 sublane pack; also a multiple of the f32 sublane (8)


def _round_up(x: int, m: int) -> int:
    return ((x + m - 1) // m) * m


# --------------------------------------------------------------------------- #
# Kernel
# --------------------------------------------------------------------------- #
def ae_kernel(x_ref,
              w1_ref, b1_ref, w2_ref, b2_ref,
              w34_ref, b34_ref, w5_ref, b5_ref, w6_ref, b6_ref,
              o_ref):
    """One (TB, padded_in) batch tile of the AE forward.

    x arrives already in bf16 (cast in the wrapper), weights in bf16, biases in
    f32.  Accumulation, bias add and ReLU are done in f32; activations are
    re-cast to bf16 only as matmul inputs.
    """
    h = x_ref[...]                                            # bf16

    # encoder: layer_1 -> ReLU -> layer_2 -> ReLU
    h = jnp.dot(h, w1_ref[...], preferred_element_type=jnp.float32) + b1_ref[...]
    h = jnp.maximum(h, 0.0).astype(jnp.bfloat16)

    h = jnp.dot(h, w2_ref[...], preferred_element_type=jnp.float32) + b2_ref[...]
    h = jnp.maximum(h, 0.0).astype(jnp.bfloat16)

    # layer_3 (no ReLU) followed by layer_4: exact fold into a single
    # 128x128 matmul (W34 = W3 @ W4, b34 = b3 @ W4 + b4), then the decoder ReLU.
    h = jnp.dot(h, w34_ref[...], preferred_element_type=jnp.float32) + b34_ref[...]
    h = jnp.maximum(h, 0.0).astype(jnp.bfloat16)

    # decoder: layer_5 -> ReLU -> layer_6
    h = jnp.dot(h, w5_ref[...], preferred_element_type=jnp.float32) + b5_ref[...]
    h = jnp.maximum(h, 0.0).astype(jnp.bfloat16)

    out = jnp.dot(h, w6_ref[...], preferred_element_type=jnp.float32) + b6_ref[...]
    o_ref[...] = out.astype(o_ref.dtype)


# --------------------------------------------------------------------------- #
# Parameter construction (PyTorch-equivalent init) and preprocessing
# --------------------------------------------------------------------------- #
def init_linear(key, in_features, out_features, dtype=jnp.float32):
    """PyTorch-style Kaiming-uniform Linear init.

    W is stored (in_features, out_features) -- transpose of nn.Linear's
    (out, in) -- so the kernel computes y = x @ W + b.  b is (1, out).
    """
    kw, kb = jax.random.split(key)
    bound = 1.0 / math.sqrt(in_features)
    w = jax.random.uniform(kw, (in_features, out_features), dtype,
                           minval=-bound, maxval=bound)
    b = jax.random.uniform(kb, (1, out_features), dtype,
                           minval=-bound, maxval=bound)
    return w, b


def make_ae_params(input_size: int, latent_dim: int, seed: int = 0):
    """Raw f32 params [w1, b1, ..., w6, b6] matching the PyTorch module."""
    keys = jax.random.split(jax.random.PRNGKey(seed), 6)
    dims = [(input_size, 256), (256, 128), (128, latent_dim),
            (latent_dim, 128), (128, 256), (256, input_size)]
    params = []
    for k, (fi, fo) in zip(keys, dims):
        params.extend(init_linear(k, fi, fo))
    return tuple(params)


def prepare_ae_params(raw_params, mxu_dtype=jnp.bfloat16):
    """Fold layer_3∘layer_4 (exact, in f32), lane-pad input_size to a multiple
    of 128 (zero-pad w1 rows / w6 cols / b6 -> padded outputs are exactly 0),
    and cast weights to bf16 (MXU operands)."""
    w1, b1, w2, b2, w3, b3, w4, b4, w5, b5, w6, b6 = raw_params
    w34 = w3 @ w4                # (128, 128)
    b34 = b3 @ w4 + b4           # (1, 128)

    input_size = w1.shape[0]
    padded_in = _round_up(input_size, LANE)
    pad = padded_in - input_size
    if pad:
        w1 = jnp.pad(w1, ((0, pad), (0, 0)))   # padded x columns are zero -> exact
        w6 = jnp.pad(w6, ((0, 0), (0, pad)))   # padded output columns are zero
        b6 = jnp.pad(b6, ((0, 0), (0, pad)))

    cast = lambda w: w.astype(mxu_dtype)
    return (cast(w1), b1, cast(w2), b2, cast(w34), b34,
            cast(w5), b5, cast(w6), b6)


# --------------------------------------------------------------------------- #
# Wrapper
# --------------------------------------------------------------------------- #
@functools.partial(jax.jit, static_argnames=("block_b",))
def ae_forward(x, params, *, block_b: int = 1024):
    """x: [B, ...]; flattened to [B, input_size].  Returns [B, input_size]."""
    w1, b1, w2, b2, w34, b34, w5, b5, w6, b6 = params
    padded_in = w1.shape[0]                      # lane-padded feature dim

    batch = x.shape[0]
    x2d = x.reshape(batch, -1)
    input_size = x2d.shape[1]
    assert input_size <= padded_in, (input_size, padded_in)

    # ---- batch-tile selection: balance tiles to minimize padding, cap by VMEM
    out_itemsize = jnp.dtype(x.dtype).itemsize
    per_row_bytes = 2 * (padded_in * 2 + padded_in * out_itemsize) + 4 * 256 * 4
    vmem_tile_budget = 40 << 20                  # generation-safe (v7x: 64 MiB/TC)
    max_tb = max(SUBLANE, (vmem_tile_budget // per_row_bytes) // SUBLANE * SUBLANE)
    block_cap = max(SUBLANE, min(block_b, max_tb))
    num_tiles = max(1, -(-batch // block_cap))   # ceil
    tb = _round_up(-(-batch // num_tiles), SUBLANE)
    padded_b = _round_up(batch, tb)
    grid = (padded_b // tb,)

    # ---- pad batch rows + feature columns; bf16 activations halve x HBM bytes
    x2d = jnp.pad(x2d, ((0, padded_b - batch), (0, padded_in - input_size)))
    x2d = x2d.astype(jnp.bfloat16)

    tile_map = lambda i: (i, 0)     # x / out: new tile per grid step
    const_map = lambda i: (0, 0)    # weights/biases: resident across all steps

    weight_specs = [pl.BlockSpec(p.shape, const_map)
                    for p in (w1, b1, w2, b2, w34, b34, w5, b5, w6, b6)]

    # ---- explicit VMEM limit: 2 bufs x (x tile + out tile) + weights + headroom
    param_bytes = sum(int(p.size) * jnp.dtype(p.dtype).itemsize for p in params)
    tile_bytes = 2 * (tb * padded_in * 2 + tb * padded_in * out_itemsize)
    interm_bytes = 4 * tb * 256 * 4
    vmem_limit = int(min(60 << 20,
                         max(16 << 20,
                             tile_bytes + param_bytes + interm_bytes + (8 << 20))))

    # Advisory cost estimate for the XLA scheduler.
    flops = 2 * padded_b * (padded_in * 256 + 256 * 128 + 128 * 128
                            + 128 * 256 + 256 * padded_in)
    bytes_accessed = (int(x2d.size) * 2
                      + padded_b * padded_in * out_itemsize
                      + param_bytes)

    out = pl.pallas_call(
        ae_kernel,
        out_shape=jax.ShapeDtypeStruct((padded_b, padded_in), x.dtype),
        grid_spec=pltpu.PrefetchScalarGridSpec(
            num_scalar_prefetch=0,
            grid=grid,
            in_specs=[pl.BlockSpec((tb, padded_in), tile_map)] + weight_specs,
            out_specs=pl.BlockSpec((tb, padded_in), tile_map),
        ),
        compiler_params=pltpu.CompilerParams(
            dimension_semantics=("parallel",),
            vmem_limit_bytes=vmem_limit),
        cost_estimate=pl.CostEstimate(flops=flops, transcendentals=0,
                                      bytes_accessed=bytes_accessed),
    )(x2d, w1, b1, w2, b2, w34, b34, w5, b5, w6, b6)

    return out[:batch, :input_size]


# --------------------------------------------------------------------------- #
# References for verification
# --------------------------------------------------------------------------- #
def ref_forward_f32(x, raw_params):
    """Pure-JAX f32 replica of the PyTorch module forward (unfolded, unpadded)."""
    w1, b1, w2, b2, w3, b3, w4, b4, w5, b5, w6, b6 = raw_params
    h = x.reshape(x.shape[0], -1)
    h = jnp.maximum(h @ w1 + b1, 0.0)
    h = jnp.maximum(h @ w2 + b2, 0.0)
    z = h @ w3 + b3
    d = jnp.maximum(z @ w4 + b4, 0.0)
    d = jnp.maximum(d @ w5 + b5, 0.0)
    return d @ w6 + b6


def ref_forward_kernel_math(x, prepared):
    """Pure-JAX replica of the exact kernel math (folded + padded + bf16 operands)."""
    w1, b1, w2, b2, w34, b34, w5, b5, w6, b6 = prepared

    h = x.reshape(x.shape[0], -1)
    in_size = h.shape[1]
    pad = w1.shape[0] - in_size
    if pad:
        h = jnp.pad(h, ((0, 0), (0, pad)))
    h = h.astype(jnp.bfloat16)

    def lin(a, w, b):
        return jnp.dot(a.astype(w.dtype), w,
                       preferred_element_type=jnp.float32) + b

    h = jnp.maximum(lin(h, w1, b1), 0.0).astype(jnp.bfloat16)
    h = jnp.maximum(lin(h, w2, b2), 0.0).astype(jnp.bfloat16)
    h = jnp.maximum(lin(h, w34, b34), 0.0).astype(jnp.bfloat16)
    h = jnp.maximum(lin(h, w5, b5), 0.0).astype(jnp.bfloat16)
    out = lin(h, w6, b6)
    return out[:, :in_size]


# --------------------------------------------------------------------------- #
# Demo / sanity check
# --------------------------------------------------------------------------- #
if __name__ == "__main__":
    # Small shapes consistent with the module's forward (x.view(B, -1)):
    # x: [batch=2, channels=4, spatial=16] -> flattened input_size = 64.
    batch, channels, spatial = 2, 4, 16
    input_size = channels * spatial          # 64
    latent_dim = 32

    x = jax.random.normal(jax.random.PRNGKey(0),
                          (batch, channels, spatial), dtype=jnp.float32)

    raw_params = make_ae_params(input_size, latent_dim, seed=0)
    params = prepare_ae_params(raw_params)

    out = ae_forward(x, params)
    jax.block_until_ready(out)

    assert out.shape == (batch, input_size), out.shape

    # Tight check vs. an exact pure-JAX mirror of the kernel math (same bf16
    # operands, same fold, same lane padding, f32 accumulation).
    mirror = ref_forward_kernel_math(x, params)
    assert jnp.allclose(out, mirror, atol=1e-2, rtol=1e-2), "mismatch vs mirror"

    # Looser check vs. the f32 PyTorch-equivalent forward (bf16 operand rounding).
    ref = ref_forward_f32(x, raw_params)
    assert jnp.allclose(out, ref, atol=1e-1, rtol=1e-1), "mismatch vs f32 reference"

    print("KERNEL_OK")
</pallas_src>

<mosaic_0001>
module attributes {stable_mosaic.version = 11 : i64} {
  func.func @ae_kernel(%arg0: i32, %arg1: memref<16x128xbf16, #tpu.memory_space<vmem>>, %arg2: memref<128x256xbf16, #tpu.memory_space<vmem>>, %arg3: memref<1x256xf32, #tpu.memory_space<vmem>>, %arg4: memref<256x128xbf16, #tpu.memory_space<vmem>>, %arg5: memref<1x128xf32, #tpu.memory_space<vmem>>, %arg6: memref<128x128xbf16, #tpu.memory_space<vmem>>, %arg7: memref<1x128xf32, #tpu.memory_space<vmem>>, %arg8: memref<128x256xbf16, #tpu.memory_space<vmem>>, %arg9: memref<1x256xf32, #tpu.memory_space<vmem>>, %arg10: memref<256x128xbf16, #tpu.memory_space<vmem>>, %arg11: memref<1x128xf32, #tpu.memory_space<vmem>>, %arg12: memref<16x128xf32, #tpu.memory_space<vmem>>) attributes {dimension_semantics = [#tpu.dimension_semantics<parallel>], iteration_bounds = array<i64: 1>, scalar_prefetch = 0 : i64, scratch_operands = 0 : i64, tpu.core_type = #tpu.core_type<tc>, window_params = [{transform_indices = @transform_0, window_bounds = array<i64: 16, 128>}, {pipeline_mode = #tpu.pipeline_mode<synchronous>, transform_indices = @transform_1, window_bounds = array<i64: 128, 256>}, {pipeline_mode = #tpu.pipeline_mode<synchronous>, transform_indices = @transform_2, window_bounds = array<i64: 1, 256>}, {pipeline_mode = #tpu.pipeline_mode<synchronous>, transform_indices = @transform_3, window_bounds = array<i64: 256, 128>}, {pipeline_mode = #tpu.pipeline_mode<synchronous>, transform_indices = @transform_4, window_bounds = array<i64: 1, 128>}, {pipeline_mode = #tpu.pipeline_mode<synchronous>, transform_indices = @transform_5, window_bounds = array<i64: 128, 128>}, {pipeline_mode = #tpu.pipeline_mode<synchronous>, transform_indices = @transform_6, window_bounds = array<i64: 1, 128>}, {pipeline_mode = #tpu.pipeline_mode<synchronous>, transform_indices = @transform_7, window_bounds = array<i64: 128, 256>}, {pipeline_mode = #tpu.pipeline_mode<synchronous>, transform_indices = @transform_8, window_bounds = array<i64: 1, 256>}, {pipeline_mode = #tpu.pipeline_mode<synchronous>, transform_indices = @transform_9, window_bounds = array<i64: 256, 128>}, {pipeline_mode = #tpu.pipeline_mode<synchronous>, transform_indices = @transform_10, window_bounds = array<i64: 1, 128>}, {transform_indices = @transform_11, window_bounds = array<i64: 16, 128>}]} {
    %c0 = arith.constant 0 : index
    %c0_0 = arith.constant 0 : index
    %0 = vector.load %arg1[%c0, %c0_0] : memref<16x128xbf16, #tpu.memory_space<vmem>>, vector<16x128xbf16>
    %c0_1 = arith.constant 0 : index
    %c0_2 = arith.constant 0 : index
    %1 = vector.load %arg2[%c0_1, %c0_2] : memref<128x256xbf16, #tpu.memory_space<vmem>>, vector<128x256xbf16>
    %cst = arith.constant dense<0.000000e+00> : vector<16x256xf32>
    %2 = tpu.matmul %0, %1, %cst {dimension_numbers = #tpu.dot_dimension_numbers<[1], [0], [0], [1], [0, 0, 1, 1], [], []>} : vector<16x128xbf16>, vector<128x256xbf16>, vector<16x256xf32> -> vector<16x256xf32>
    %c0_3 = arith.constant 0 : index
    %c0_4 = arith.constant 0 : index
    %3 = vector.load %arg3[%c0_3, %c0_4] : memref<1x256xf32, #tpu.memory_space<vmem>>, vector<1x256xf32>
    %4 = vector.broadcast %3 : vector<1x256xf32> to vector<16x256xf32>
    %5 = arith.addf %2, %4 : vector<16x256xf32>
    %cst_5 = arith.constant 0.000000e+00 : f32
    %6 = vector.broadcast %cst_5 : f32 to vector<16x256xf32>
    %7 = arith.maximumf %5, %6 : vector<16x256xf32>
    %8 = arith.truncf %7 : vector<16x256xf32> to vector<16x256xbf16>
    %c0_6 = arith.constant 0 : index
    %c0_7 = arith.constant 0 : index
    %9 = vector.load %arg4[%c0_6, %c0_7] : memref<256x128xbf16, #tpu.memory_space<vmem>>, vector<256x128xbf16>
    %cst_8 = arith.constant dense<0.000000e+00> : vector<16x128xf32>
    %10 = tpu.matmul %8, %9, %cst_8 {dimension_numbers = #tpu.dot_dimension_numbers<[1], [0], [0], [1], [0, 0, 1, 1], [], []>} : vector<16x256xbf16>, vector<256x128xbf16>, vector<16x128xf32> -> vector<16x128xf32>
    %c0_9 = arith.constant 0 : index
    %c0_10 = arith.constant 0 : index
    %11 = vector.load %arg5[%c0_9, %c0_10] : memref<1x128xf32, #tpu.memory_space<vmem>>, vector<1x128xf32>
    %12 = vector.broadcast %11 : vector<1x128xf32> to vector<16x128xf32>
    %13 = arith.addf %10, %12 : vector<16x128xf32>
    %cst_11 = arith.constant 0.000000e+00 : f32
    %14 = vector.broadcast %cst_11 : f32 to vector<16x128xf32>
    %15 = arith.maximumf %13, %14 : vector<16x128xf32>
    %16 = arith.truncf %15 : vector<16x128xf32> to vector<16x128xbf16>
    %c0_12 = arith.constant 0 : index
    %c0_13 = arith.constant 0 : index
    %17 = vector.load %arg6[%c0_12, %c0_13] : memref<128x128xbf16, #tpu.memory_space<vmem>>, vector<128x128xbf16>
    %cst_14 = arith.constant dense<0.000000e+00> : vector<16x128xf32>
    %18 = tpu.matmul %16, %17, %cst_14 {dimension_numbers = #tpu.dot_dimension_numbers<[1], [0], [0], [1], [0, 0, 1, 1], [], []>} : vector<16x128xbf16>, vector<128x128xbf16>, vector<16x128xf32> -> vector<16x128xf32>
    %c0_15 = arith.constant 0 : index
    %c0_16 = arith.constant 0 : index
    %19 = vector.load %arg7[%c0_15, %c0_16] : memref<1x128xf32, #tpu.memory_space<vmem>>, vector<1x128xf32>
    %20 = vector.broadcast %19 : vector<1x128xf32> to vector<16x128xf32>
    %21 = arith.addf %18, %20 : vector<16x128xf32>
    %cst_17 = arith.constant 0.000000e+00 : f32
    %22 = vector.broadcast %cst_17 : f32 to vector<16x128xf32>
    %23 = arith.maximumf %21, %22 : vector<16x128xf32>
    %24 = arith.truncf %23 : vector<16x128xf32> to vector<16x128xbf16>
    %c0_18 = arith.constant 0 : index
    %c0_19 = arith.constant 0 : index
    %25 = vector.load %arg8[%c0_18, %c0_19] : memref<128x256xbf16, #tpu.memory_space<vmem>>, vector<128x256xbf16>
    %cst_20 = arith.constant dense<0.000000e+00> : vector<16x256xf32>
    %26 = tpu.matmul %24, %25, %cst_20 {dimension_numbers = #tpu.dot_dimension_numbers<[1], [0], [0], [1], [0, 0, 1, 1], [], []>} : vector<16x128xbf16>, vector<128x256xbf16>, vector<16x256xf32> -> vector<16x256xf32>
    %c0_21 = arith.constant 0 : index
    %c0_22 = arith.constant 0 : index
    %27 = vector.load %arg9[%c0_21, %c0_22] : memref<1x256xf32, #tpu.memory_space<vmem>>, vector<1x256xf32>
    %28 = vector.broadcast %27 : vector<1x256xf32> to vector<16x256xf32>
    %29 = arith.addf %26, %28 : vector<16x256xf32>
    %cst_23 = arith.constant 0.000000e+00 : f32
    %30 = vector.broadcast %cst_23 : f32 to vector<16x256xf32>
    %31 = arith.maximumf %29, %30 : vector<16x256xf32>
    %32 = arith.truncf %31 : vector<16x256xf32> to vector<16x256xbf16>
    %c0_24 = arith.constant 0 : index
    %c0_25 = arith.constant 0 : index
    %33 = vector.load %arg10[%c0_24, %c0_25] : memref<256x128xbf16, #tpu.memory_space<vmem>>, vector<256x128xbf16>
    %cst_26 = arith.constant dense<0.000000e+00> : vector<16x128xf32>
    %34 = tpu.matmul %32, %33, %cst_26 {dimension_numbers = #tpu.dot_dimension_numbers<[1], [0], [0], [1], [0, 0, 1, 1], [], []>} : vector<16x256xbf16>, vector<256x128xbf16>, vector<16x128xf32> -> vector<16x128xf32>
    %c0_27 = arith.constant 0 : index
    %c0_28 = arith.constant 0 : index
    %35 = vector.load %arg11[%c0_27, %c0_28] : memref<1x128xf32, #tpu.memory_space<vmem>>, vector<1x128xf32>
    %36 = vector.broadcast %35 : vector<1x128xf32> to vector<16x128xf32>
    %37 = arith.addf %34, %36 : vector<16x128xf32>
    %c0_29 = arith.constant 0 : index
    %c0_30 = arith.constant 0 : index
    %38 = vector.load %arg12[%c0_29, %c0_30] : memref<16x128xf32, #tpu.memory_space<vmem>>, vector<16x128xf32>
    tpu.vector_store %arg12[%c0_29, %c0_30], %37 {strides = array<i32>} : memref<16x128xf32, #tpu.memory_space<vmem>>, vector<16x128xf32>,
    return
  }
  func.func @transform_0(%arg0: i32) -> (i32, i32) {
    %c0_i32 = arith.constant 0 : i32
    %c0_i32_0 = arith.constant 0 : i32
    return %arg0, %c0_i32 : i32, i32
  }
  func.func @transform_1(%arg0: i32) -> (i32, i32) {
    %c0_i32 = arith.constant 0 : i32
    %c0_i32_0 = arith.constant 0 : i32
    %c0_i32_1 = arith.constant 0 : i32
    return %c0_i32, %c0_i32_0 : i32, i32
  }
  func.func @transform_2(%arg0: i32) -> (i32, i32) {
    %c0_i32 = arith.constant 0 : i32
    %c0_i32_0 = arith.constant 0 : i32
    %c0_i32_1 = arith.constant 0 : i32
    return %c0_i32, %c0_i32_0 : i32, i32
  }
  func.func @transform_3(%arg0: i32) -> (i32, i32) {
    %c0_i32 = arith.constant 0 : i32
    %c0_i32_0 = arith.constant 0 : i32
    %c0_i32_1 = arith.constant 0 : i32
    return %c0_i32, %c0_i32_0 : i32, i32
  }
  func.func @transform_4(%arg0: i32) -> (i32, i32) {
    %c0_i32 = arith.constant 0 : i32
    %c0_i32_0 = arith.constant 0 : i32
    %c0_i32_1 = arith.constant 0 : i32
    return %c0_i32, %c0_i32_0 : i32, i32
  }
  func.func @transform_5(%arg0: i32) -> (i32, i32) {
    %c0_i32 = arith.constant 0 : i32
    %c0_i32_0 = arith.constant 0 : i32
    %c0_i32_1 = arith.constant 0 : i32
    return %c0_i32, %c0_i32_0 : i32, i32
  }
  func.func @transform_6(%arg0: i32) -> (i32, i32) {
    %c0_i32 = arith.constant 0 : i32
    %c0_i32_0 = arith.constant 0 : i32
    %c0_i32_1 = arith.constant 0 : i32
    return %c0_i32, %c0_i32_0 : i32, i32
  }
  func.func @transform_7(%arg0: i32) -> (i32, i32) {
    %c0_i32 = arith.constant 0 : i32
    %c0_i32_0 = arith.constant 0 : i32
    %c0_i32_1 = arith.constant 0 : i32
    return %c0_i32, %c0_i32_0 : i32, i32
  }
  func.func @transform_8(%arg0: i32) -> (i32, i32) {
    %c0_i32 = arith.constant 0 : i32
    %c0_i32_0 = arith.constant 0 : i32
    %c0_i32_1 = arith.constant 0 : i32
    return %c0_i32, %c0_i32_0 : i32, i32
  }
  func.func @transform_9(%arg0: i32) -> (i32, i32) {
    %c0_i32 = arith.constant 0 : i32
    %c0_i32_0 = arith.constant 0 : i32
    %c0_i32_1 = arith.constant 0 : i32
    return %c0_i32, %c0_i32_0 : i32, i32
  }
  func.func @transform_10(%arg0: i32) -> (i32, i32) {
    %c0_i32 = arith.constant 0 : i32
    %c0_i32_0 = arith.constant 0 : i32
    %c0_i32_1 = arith.constant 0 : i32
    return %c0_i32, %c0_i32_0 : i32, i32
  }
  func.func @transform_11(%arg0: i32) -> (i32, i32) {
    %c0_i32 = arith.constant 0 : i32
    %c0_i32_0 = arith.constant 0 : i32
    return %arg0, %c0_i32 : i32, i32
  }
}

</mosaic_0001>

<llo_original>
// kernel: ae_forward.1
$region0: #{ae_forward.1}
  #allocation0 [shape = 'u32[]', space=smem, size = 0x4, offset = 0x4, fixed_abs, tag = 'smem constant byte address 0x4 - core index']
  #allocation1 [shape = 'u32[72,128]{1,0:T(1,128)}', space=vmem, size = 0x9000, scoped, tag = 'internal scratch']
  %s0 = inlined_call_operand.vmem [shape: bf16[16,128], index: 0, kind: input, shape index: {}]
  %s1 = inlined_call_operand.hbm [shape: bf16[128,256], index: 1, kind: input, shape index: {}]
  %s2 = inlined_call_operand.vmem [shape: f32[1,256], index: 2, kind: input, shape index: {}]
  %s3 = inlined_call_operand.hbm [shape: bf16[256,128], index: 3, kind: input, shape index: {}]
  %s4 = inlined_call_operand.vmem [shape: f32[1,128], index: 4, kind: input, shape index: {}]
  %s5 = inlined_call_operand.hbm [shape: bf16[128,128], index: 5, kind: input, shape index: {}]
  %s6 = inlined_call_operand.vmem [shape: f32[1,128], index: 6, kind: input, shape index: {}]
  %s7 = inlined_call_operand.hbm [shape: bf16[128,256], index: 7, kind: input, shape index: {}]
  %s8 = inlined_call_operand.vmem [shape: f32[1,256], index: 8, kind: input, shape index: {}]
  %s9 = inlined_call_operand.hbm [shape: bf16[256,128], index: 9, kind: input, shape index: {}]
  %s10 = inlined_call_operand.vmem [shape: f32[1,128], index: 10, kind: input, shape index: {}]
  %s11 = inlined_call_operand.vmem [shape: f32[16,128], index: 11, kind: output, shape index: {}]
  %s12 = sld [smem:[#allocation0]]
  $region74: #{ae_forward.1} parent=0
    _
  %s14 = ssub.s32 1, %s12
  %s15 = scalar_select 0, %s14, %s12
  $region1: #{ae_forward.1} parent=0
    #allocation2 [shape = 'u8[65536]{0}', space=vmem, size = 0x10000, scoped, tag = 'input window, operand 1, single buffered']
    #allocation3 [shape = 's32[1]{0}', space=sflag, size = 0x4, scoped, tag = 'scoped memory for ae_forward.1']
    #allocation4 [shape = 'u8[65536]{0}', space=vmem, size = 0x10000, scoped, tag = 'input window, operand 3, single buffered']
    #allocation5 [shape = 's32[1]{0}', space=sflag, size = 0x4, scoped, tag = 'scoped memory for ae_forward.1']
    #allocation6 [shape = 'u8[32768]{0}', space=vmem, size = 0x8000, scoped, tag = 'input window, operand 5, single buffered']
    #allocation7 [shape = 'u8[65536]{0}', space=vmem, size = 0x10000, scoped, tag = 'input window, operand 7, single buffered']
    #allocation8 [shape = 's32[1]{0}', space=sflag, size = 0x4, scoped, tag = 'scoped memory for ae_forward.1']
    #allocation9 [shape = 'u8[65536]{0}', space=vmem, size = 0x10000, scoped, tag = 'input window, operand 9, single buffered']
    %16 = vsyncpa [#allocation3], 0
    %17 = vsyncpa [#allocation5], 0
    %18 = vsyncpa [#allocation8], 0
    // Predicated region
    $region2: #{ae_forward.1} parent=1 // pred_check
      _
    $region3: #{ae_forward.1} parent=1 // pred_check_branch
      %20 = sbr.rel (0) target = $region5
    $region4: #{ae_forward.1} parent=1 // pred_region
      _
    $region5: #{ae_forward.1} parent=1 // pred_fallthru
      _
    // Predicated region
    $region6: #{ae_forward.1} parent=1 // pred_check
      _
    $region7: #{ae_forward.1} parent=1 // pred_check_branch
      %22 = sbr.rel (0) target = $region9
    $region8: #{ae_forward.1} parent=1 // pred_region
      %24 = vsyncadd [#allocation3], 0
      %s25 = sshll.u32 %s1, 4
      %s26 = int_to_ptr.hbm [resolvable:$true] %s25
      %s27 = sshll.u32 [#allocation2], 4
      %s28 = int_to_ptr.vmem [resolvable:$true] %s27
      %33 = dma.hbm_to_vmem [thread:$0]  %s26, 2048, %s28, [#allocation3], 128, 128, 8
    $region9: #{ae_forward.1} parent=1 // pred_fallthru
      _
    // Predicated region
    $region10: #{ae_forward.1} parent=1 // pred_check
      _
    $region11: #{ae_forward.1} parent=1 // pred_check_branch
      %35 = sbr.rel (0) target = $region13
    $region12: #{ae_forward.1} parent=1 // pred_region
      _
    $region13: #{ae_forward.1} parent=1 // pred_fallthru
      _
    // Predicated region
    $region14: #{ae_forward.1} parent=1 // pred_check
      _
    $region15: #{ae_forward.1} parent=1 // pred_check_branch
      %37 = sbr.rel (0) target = $region17
    $region16: #{ae_forward.1} parent=1 // pred_region
      %39 = vsyncadd [#allocation5], 0
      %s40 = sshll.u32 %s3, 4
      %s41 = int_to_ptr.hbm [resolvable:$true] %s40
      %s42 = sshll.u32 [#allocation4], 4
      %s43 = int_to_ptr.vmem [resolvable:$true] %s42
      %48 = dma.hbm_to_vmem [thread:$0]  %s41, 2048, %s43, [#allocation5], 64, 64, 4
    $region17: #{ae_forward.1} parent=1 // pred_fallthru
      _
    // Predicated region
    $region18: #{ae_forward.1} parent=1 // pred_check
      _
    $region19: #{ae_forward.1} parent=1 // pred_check_branch
      %50 = sbr.rel (0) target = $region21
    $region20: #{ae_forward.1} parent=1 // pred_region
      _
    $region21: #{ae_forward.1} parent=1 // pred_fallthru
      _
    // Predicated region
    $region22: #{ae_forward.1} parent=1 // pred_check
      _
    $region23: #{ae_forward.1} parent=1 // pred_check_branch
      %52 = sbr.rel (0) target = $region25
    $region24: #{ae_forward.1} parent=1 // pred_region
      %54 = vsyncadd [#allocation5], 0
      %s55 = sshll.u32 %s5, 4
      %s56 = int_to_ptr.hbm [resolvable:$true] %s55
      %s57 = sshll.u32 [#allocation6], 4
      %s58 = int_to_ptr.vmem [resolvable:$true] %s57
      %63 = dma.hbm_to_vmem [thread:$0]  %s56, 1024, %s58, [#allocation5], 64, 64, 4
    $region25: #{ae_forward.1} parent=1 // pred_fallthru
      _
    // Predicated region
    $region26: #{ae_forward.1} parent=1 // pred_check
      _
    $region27: #{ae_forward.1} parent=1 // pred_check_branch
      %65 = sbr.rel (0) target = $region29
    $region28: #{ae_forward.1} parent=1 // pred_region
      _
    $region29: #{ae_forward.1} parent=1 // pred_fallthru
      _
    // Predicated region
    $region30: #{ae_forward.1} parent=1 // pred_check
      _
    $region31: #{ae_forward.1} parent=1 // pred_check_branch
      %67 = sbr.rel (0) target = $region33
    $region32: #{ae_forward.1} parent=1 // pred_region
      %69 = vsyncadd [#allocation8], 0
      %s70 = sshll.u32 %s7, 4
      %s71 = int_to_ptr.hbm [resolvable:$true] %s70
      %s72 = sshll.u32 [#allocation7], 4
      %s73 = int_to_ptr.vmem [resolvable:$true] %s72
      %78 = dma.hbm_to_vmem [thread:$0]  %s71, 2048, %s73, [#allocation8], 128, 128, 8
    $region33: #{ae_forward.1} parent=1 // pred_fallthru
      _
    // Predicated region
    $region34: #{ae_forward.1} parent=1 // pred_check
      _
    $region35: #{ae_forward.1} parent=1 // pred_check_branch
      %80 = sbr.rel (0) target = $region37
    $region36: #{ae_forward.1} parent=1 // pred_region
      _
    $region37: #{ae_forward.1} parent=1 // pred_fallthru
      _
    // Predicated region
    $region38: #{ae_forward.1} parent=1 // pred_check
      _
    $region39: #{ae_forward.1} parent=1 // pred_check_branch
      %82 = sbr.rel (0) target = $region41
    $region40: #{ae_forward.1} parent=1 // pred_region
      %84 = vsyncadd [#allocation8], 0
      %s85 = sshll.u32 %s9, 4
      %s86 = int_to_ptr.hbm [resolvable:$true] %s85
      %s87 = sshll.u32 [#allocation9], 4
      %s88 = int_to_ptr.vmem [resolvable:$true] %s87
      %93 = dma.hbm_to_vmem [thread:$0]  %s86, 2048, %s88, [#allocation8], 64, 64, 4
    $region41: #{ae_forward.1} parent=1 // pred_fallthru
      _
    // Predicated region
    $region42: #{ae_forward.1} parent=1 // pred_check
      _
    $region43: #{ae_forward.1} parent=1 // pred_check_branch
      %95 = sbr.rel (0) target = $region45
    $region44: #{ae_forward.1} parent=1 // pred_region
      _
    $region45: #{ae_forward.1} parent=1 // pred_fallthru
      _
    // Predicated region
    $region46: #{ae_forward.1} parent=1 // pred_check
      _
    $region47: #{ae_forward.1} parent=1 // pred_check_branch
      %97 = sbr.rel (0) target = $region49
    $region48: #{ae_forward.1} parent=1 // pred_region
      %99 = dma.done [#allocation3], 2048
    $region49: #{ae_forward.1} parent=1 // pred_fallthru
      _
    // Predicated region
    $region50: #{ae_forward.1} parent=1 // pred_check
      _
    $region51: #{ae_forward.1} parent=1 // pred_check_branch
      %101 = sbr.rel (0) target = $region53
    $region52: #{ae_forward.1} parent=1 // pred_region
      %103 = dma.done [#allocation5], 2048
    $region53: #{ae_forward.1} parent=1 // pred_fallthru
      _
    // Predicated region
    $region54: #{ae_forward.1} parent=1 // pred_check
      _
    $region55: #{ae_forward.1} parent=1 // pred_check_branch
      %105 = sbr.rel (0) target = $region57
    $region56: #{ae_forward.1} parent=1 // pred_region
      %107 = dma.done [#allocation5], 1024
    $region57: #{ae_forward.1} parent=1 // pred_fallthru
      _
    // Predicated region
    $region58: #{ae_forward.1} parent=1 // pred_check
      _
    $region59: #{ae_forward.1} parent=1 // pred_check_branch
      %109 = sbr.rel (0) target = $region61
    $region60: #{ae_forward.1} parent=1 // pred_region
      %111 = dma.done [#allocation8], 2048
    $region61: #{ae_forward.1} parent=1 // pred_fallthru
      _
    // Predicated region
    $region62: #{ae_forward.1} parent=1 // pred_check
      _
    $region63: #{ae_forward.1} parent=1 // pred_check_branch
      %113 = sbr.rel (0) target = $region65
    $region64: #{ae_forward.1} parent=1 // pred_region
      %115 = dma.done [#allocation8], 2048
    $region65: #{ae_forward.1} parent=1 // pred_fallthru
      _
    %v116 = vld [vmem:[%s0] sm:$0xf]
    %v117 = vld [vmem:[%s0 + $0x4] sm:$0xf]
    %v118 = vld [vmem:[#allocation2] sm:$0xff]
    %v119 = vld [vmem:[#allocation2 + $0x8] sm:$0xff]
    %v120 = vld [vmem:[#allocation2 + $0x10] sm:$0xff]
    %v121 = vld [vmem:[#allocation2 + $0x18] sm:$0xff]
    %v122 = vld [vmem:[#allocation2 + $0x20] sm:$0xff]
    %v123 = vld [vmem:[#allocation2 + $0x28] sm:$0xff]
    %v124 = vld [vmem:[#allocation2 + $0x30] sm:$0xff]
    %v125 = vld [vmem:[#allocation2 + $0x38] sm:$0xff]
    %v126 = vld [vmem:[#allocation2 + $0x40] sm:$0xff]
    %v127 = vld [vmem:[#allocation2 + $0x48] sm:$0xff]
    %v128 = vld [vmem:[#allocation2 + $0x50] sm:$0xff]
    %v129 = vld [vmem:[#allocation2 + $0x58] sm:$0xff]
    %v130 = vld [vmem:[#allocation2 + $0x60] sm:$0xff]
    %v131 = vld [vmem:[#allocation2 + $0x68] sm:$0xff]
    %v132 = vld [vmem:[#allocation2 + $0x70] sm:$0xff]
    %v133 = vld [vmem:[#allocation2 + $0x78] sm:$0xff]
    %v134 = vld [vmem:[%s2] sm:$0x3]
    %v136 = vperm.slane %v134, 0
    %v137 = vperm.slane %v134, 1
    %v142 = vunpack.c.l.b16 %v116
    %v143 = vunpack.c.l.b16 %v117
    %v144 = vpack.c.b16 %v143, %v142
    %v162 = vunpack.c.l.b16 %v118
    %v163 = vunpack.c.h.b16 %v118
    %v164 = vunpack.c.l.b16 %v119
    %v165 = vunpack.c.h.b16 %v119
    %v166 = vunpack.c.l.b16 %v120
    %v167 = vunpack.c.h.b16 %v120
    %v168 = vunpack.c.l.b16 %v121
    %v169 = vunpack.c.h.b16 %v121
    %v170 = vunpack.c.l.b16 %v122
    %v171 = vunpack.c.h.b16 %v122
    %v172 = vunpack.c.l.b16 %v123
    %v173 = vunpack.c.h.b16 %v123
    %v174 = vunpack.c.l.b16 %v124
    %v175 = vunpack.c.h.b16 %v124
    %v176 = vunpack.c.l.b16 %v125
    %v177 = vunpack.c.h.b16 %v125
    %v178 = vunpack.c.l.b16 %v126
    %v179 = vunpack.c.h.b16 %v126
    %v180 = vunpack.c.l.b16 %v127
    %v181 = vunpack.c.h.b16 %v127
    %v182 = vunpack.c.l.b16 %v128
    %v183 = vunpack.c.h.b16 %v128
    %v184 = vunpack.c.l.b16 %v129
    %v185 = vunpack.c.h.b16 %v129
    %v186 = vunpack.c.l.b16 %v130
    %v187 = vunpack.c.h.b16 %v130
    %v188 = vunpack.c.l.b16 %v131
    %v189 = vunpack.c.h.b16 %v131
    %v190 = vunpack.c.l.b16 %v132
    %v191 = vunpack.c.h.b16 %v132
    %v192 = vunpack.c.l.b16 %v133
    %v193 = vunpack.c.h.b16 %v133
    %v194 = vpack.c.b16 %v164, %v162
    %v195 = vpack.c.b16 %v165, %v163
    %v196 = vpack.c.b16 %v168, %v166
    %v197 = vpack.c.b16 %v169, %v167
    %v198 = vpack.c.b16 %v172, %v170
    %v199 = vpack.c.b16 %v173, %v171
    %v200 = vpack.c.b16 %v176, %v174
    %v201 = vpack.c.b16 %v177, %v175
    %v202 = vpack.c.b16 %v180, %v178
    %v203 = vpack.c.b16 %v181, %v179
    %v204 = vpack.c.b16 %v184, %v182
    %v205 = vpack.c.b16 %v185, %v183
    %v206 = vpack.c.b16 %v188, %v186
    %v207 = vpack.c.b16 %v189, %v187
    %v208 = vpack.c.b16 %v192, %v190
    %v209 = vpack.c.b16 %v193, %v191
    %226 = vmatpush.bf16.msra.mxu0 %v208
    %227 = vmatpush.bf16.msra.mxu0 %v206
    %228 = vmatpush.bf16.msra.mxu0 %v204
    %229 = vmatpush.bf16.msra.mxu0 %v202
    %230 = vmatpush.bf16.msra.mxu0 %v200
    %231 = vmatpush.bf16.msra.mxu0 %v198
    %232 = vmatpush.bf16.msra.mxu0 %v196
    %233 = vmatpush.bf16.msra.mxu0 %v194
    %234 = vmatmul.bf16.gmra.mxu0 %v144
    %v235 = vpop.f32.mrf.mxu0
    %v236 = vadd.f32 %v136, %v235
    %v237 = vpop.f32.mrf.mxu0
    %v238 = vadd.f32 %v136, %v237
    %239 = vdwg.mxu0
    %240 = vmatpush.bf16.msra.mxu0 %v209
    %241 = vmatpush.bf16.msra.mxu0 %v207
    %242 = vmatpush.bf16.msra.mxu0 %v205
    %243 = vmatpush.bf16.msra.mxu0 %v203
    %244 = vmatpush.bf16.msra.mxu0 %v201
    %245 = vmatpush.bf16.msra.mxu0 %v199
    %246 = vmatpush.bf16.msra.mxu0 %v197
    %247 = vmatpush.bf16.msra.mxu0 %v195
    %248 = vmatmul.bf16.gmra.mxu0 %v144
    %v249 = vpop.f32.mrf.mxu0
    %v250 = vadd.f32 %v137, %v249
    %v251 = vpop.f32.mrf.mxu0
    %v252 = vadd.f32 %v137, %v251
    %253 = vdwg.mxu0
    %v254 = vmax.f32 %v236, 0.0
    %v255 = vmax.f32 %v250, 0.0
    %v256 = vmax.f32 %v238, 0.0
    %v257 = vmax.f32 %v252, 0.0
    %v258 = vpack.c.bf16 %v256, %v254
    %v259 = vpack.c.bf16 %v257, %v255
    %v260 = vld [vmem:[#allocation4] sm:$0xf]
    %v261 = vld [vmem:[#allocation4 + $0x4] sm:$0xf]
    %v262 = vld [vmem:[#allocation4 + $0x8] sm:$0xf]
    %v263 = vld [vmem:[#allocation4 + $0xc] sm:$0xf]
    %v264 = vld [vmem:[#allocation4 + $0x10] sm:$0xf]
    %v265 = vld [vmem:[#allocation4 + $0x14] sm:$0xf]
    %v266 = vld [vmem:[#allocation4 + $0x18] sm:$0xf]
    %v267 = vld [vmem:[#allocation4 + $0x1c] sm:$0xf]
    %v268 = vld [vmem:[#allocation4 + $0x20] sm:$0xf]
    %v269 = vld [vmem:[#allocation4 + $0x24] sm:$0xf]
    %v270 = vld [vmem:[#allocation4 + $0x28] sm:$0xf]
    %v271 = vld [vmem:[#allocation4 + $0x2c] sm:$0xf]
    %v272 = vld [vmem:[#allocation4 + $0x30] sm:$0xf]
    %v273 = vld [vmem:[#allocation4 + $0x34] sm:$0xf]
    %v274 = vld [vmem:[#allocation4 + $0x38] sm:$0xf]
    %v275 = vld [vmem:[#allocation4 + $0x3c] sm:$0xf]
    %v276 = vld [vmem:[#allocation4 + $0x40] sm:$0xf]
    %v277 = vld [vmem:[#allocation4 + $0x44] sm:$0xf]
    %v278 = vld [vmem:[#allocation4 + $0x48] sm:$0xf]
    %v279 = vld [vmem:[#allocation4 + $0x4c] sm:$0xf]
    %v280 = vld [vmem:[#allocation4 + $0x50] sm:$0xf]
    %v281 = vld [vmem:[#allocation4 + $0x54] sm:$0xf]
    %v282 = vld [vmem:[#allocation4 + $0x58] sm:$0xf]
    %v283 = vld [vmem:[#allocation4 + $0x5c] sm:$0xf]
    %v284 = vld [vmem:[#allocation4 + $0x60] sm:$0xf]
    %v285 = vld [vmem:[#allocation4 + $0x64] sm:$0xf]
    %v286 = vld [vmem:[#allocation4 + $0x68] sm:$0xf]
    %v287 = vld [vmem:[#allocation4 + $0x6c] sm:$0xf]
    %v288 = vld [vmem:[#allocation4 + $0x70] sm:$0xf]
    %v289 = vld [vmem:[#allocation4 + $0x74] sm:$0xf]
    %v290 = vld [vmem:[#allocation4 + $0x78] sm:$0xf]
    %v291 = vld [vmem:[#allocation4 + $0x7c] sm:$0xf]
    %v292 = vld [vmem:[%s4] sm:$0x1]
    %v294 = vperm.slane %v292, 0
    %v328 = vunpack.c.l.b16 %v260
    %v329 = vunpack.c.l.b16 %v261
    %v330 = vunpack.c.l.b16 %v262
    %v331 = vunpack.c.l.b16 %v263
    %v332 = vunpack.c.l.b16 %v264
    %v333 = vunpack.c.l.b16 %v265
    %v334 = vunpack.c.l.b16 %v266
    %v335 = vunpack.c.l.b16 %v267
    %v336 = vunpack.c.l.b16 %v268
    %v337 = vunpack.c.l.b16 %v269
    %v338 = vunpack.c.l.b16 %v270
    %v339 = vunpack.c.l.b16 %v271
    %v340 = vunpack.c.l.b16 %v272
    %v341 = vunpack.c.l.b16 %v273
    %v342 = vunpack.c.l.b16 %v274
    %v343 = vunpack.c.l.b16 %v275
    %v344 = vunpack.c.l.b16 %v276
    %v345 = vunpack.c.l.b16 %v277
    %v346 = vunpack.c.l.b16 %v278
    %v347 = vunpack.c.l.b16 %v279
    %v348 = vunpack.c.l.b16 %v280
    %v349 = vunpack.c.l.b16 %v281
    %v350 = vunpack.c.l.b16 %v282
    %v351 = vunpack.c.l.b16 %v283
    %v352 = vunpack.c.l.b16 %v284
    %v353 = vunpack.c.l.b16 %v285
    %v354 = vunpack.c.l.b16 %v286
    %v355 = vunpack.c.l.b16 %v287
    %v356 = vunpack.c.l.b16 %v288
    %v357 = vunpack.c.l.b16 %v289
    %v358 = vunpack.c.l.b16 %v290
    %v359 = vunpack.c.l.b16 %v291
    %v360 = vpack.c.b16 %v329, %v328
    %v361 = vpack.c.b16 %v331, %v330
    %v362 = vpack.c.b16 %v333, %v332
    %v363 = vpack.c.b16 %v335, %v334
    %v364 = vpack.c.b16 %v337, %v336
    %v365 = vpack.c.b16 %v339, %v338
    %v366 = vpack.c.b16 %v341, %v340
    %v367 = vpack.c.b16 %v343, %v342
    %v368 = vpack.c.b16 %v345, %v344
    %v369 = vpack.c.b16 %v347, %v346
    %v370 = vpack.c.b16 %v349, %v348
    %v371 = vpack.c.b16 %v351, %v350
    %v372 = vpack.c.b16 %v353, %v352
    %v373 = vpack.c.b16 %v355, %v354
    %v374 = vpack.c.b16 %v357, %v356
    %v375 = vpack.c.b16 %v359, %v358
    %392 = vmatpush.bf16.msra.mxu0 %v367
    %393 = vmatpush.bf16.msra.mxu0 %v366
    %394 = vmatpush.bf16.msra.mxu0 %v365
    %395 = vmatpush.bf16.msra.mxu0 %v364
    %396 = vmatpush.bf16.msra.mxu0 %v363
    %397 = vmatpush.bf16.msra.mxu0 %v362
    %398 = vmatpush.bf16.msra.mxu0 %v361
    %399 = vmatpush.bf16.msra.mxu0 %v360
    %400 = vmatmul.bf16.gmra.mxu0 %v258
    %v401 = vpop.f32.mrf.mxu0
    %v402 = vadd.f32 %v294, %v401
    %v403 = vpop.f32.mrf.mxu0
    %v404 = vadd.f32 %v294, %v403
    %405 = vdwg.mxu0
    %406 = vmatpush.bf16.msra.mxu0 %v375
    %407 = vmatpush.bf16.msra.mxu0 %v374
    %408 = vmatpush.bf16.msra.mxu0 %v373
    %409 = vmatpush.bf16.msra.mxu0 %v372
    %410 = vmatpush.bf16.msra.mxu0 %v371
    %411 = vmatpush.bf16.msra.mxu0 %v370
    %412 = vmatpush.bf16.msra.mxu0 %v369
    %413 = vmatpush.bf16.msra.mxu0 %v368
    %414 = vmatmul.bf16.gmra.mxu0 %v259
    %v415 = vpop.f32.mrf.mxu0
    %v416 = vadd.f32 %v402, %v415
    %v417 = vpop.f32.mrf.mxu0
    %v418 = vadd.f32 %v404, %v417
    %419 = vdwg.mxu0
    %v420 = vmax.f32 %v416, 0.0
    %v421 = vmax.f32 %v418, 0.0
    %v422 = vpack.c.bf16 %v421, %v420
    %v423 = vld [vmem:[#allocation6] sm:$0xf]
    %v424 = vld [vmem:[#allocation6 + $0x4] sm:$0xf]
    %v425 = vld [vmem:[#allocation6 + $0x8] sm:$0xf]
    %v426 = vld [vmem:[#allocation6 + $0xc] sm:$0xf]
    %v427 = vld [vmem:[#allocation6 + $0x10] sm:$0xf]
    %v428 = vld [vmem:[#allocation6 + $0x14] sm:$0xf]
    %v429 = vld [vmem:[#allocation6 + $0x18] sm:$0xf]
    %v430 = vld [vmem:[#allocation6 + $0x1c] sm:$0xf]
    %v431 = vld [vmem:[#allocation6 + $0x20] sm:$0xf]
    %v432 = vld [vmem:[#allocation6 + $0x24] sm:$0xf]
    %v433 = vld [vmem:[#allocation6 + $0x28] sm:$0xf]
    %v434 = vld [vmem:[#allocation6 + $0x2c] sm:$0xf]
    %v435 = vld [vmem:[#allocation6 + $0x30] sm:$0xf]
    %v436 = vld [vmem:[#allocation6 + $0x34] sm:$0xf]
    %v437 = vld [vmem:[#allocation6 + $0x38] sm:$0xf]
    %v438 = vld [vmem:[#allocation6 + $0x3c] sm:$0xf]
    %v439 = vld [vmem:[%s6] sm:$0x1]
    %v441 = vperm.slane %v439, 0
    %v459 = vunpack.c.l.b16 %v423
    %v460 = vunpack.c.l.b16 %v424
    %v461 = vunpack.c.l.b16 %v425
    %v462 = vunpack.c.l.b16 %v426
    %v463 = vunpack.c.l.b16 %v427
    %v464 = vunpack.c.l.b16 %v428
    %v465 = vunpack.c.l.b16 %v429
    %v466 = vunpack.c.l.b16 %v430
    %v467 = vunpack.c.l.b16 %v431
    %v468 = vunpack.c.l.b16 %v432
    %v469 = vunpack.c.l.b16 %v433
    %v470 = vunpack.c.l.b16 %v434
    %v471 = vunpack.c.l.b16 %v435
    %v472 = vunpack.c.l.b16 %v436
    %v473 = vunpack.c.l.b16 %v437
    %v474 = vunpack.c.l.b16 %v438
    %v475 = vpack.c.b16 %v460, %v459
    %v476 = vpack.c.b16 %v462, %v461
    %v477 = vpack.c.b16 %v464, %v463
    %v478 = vpack.c.b16 %v466, %v465
    %v479 = vpack.c.b16 %v468, %v467
    %v480 = vpack.c.b16 %v470, %v469
    %v481 = vpack.c.b16 %v472, %v471
    %v482 = vpack.c.b16 %v474, %v473
    %491 = vmatpush.bf16.msra.mxu0 %v482
    %492 = vmatpush.bf16.msra.mxu0 %v481
    %493 = vmatpush.bf16.msra.mxu0 %v480
    %494 = vmatpush.bf16.msra.mxu0 %v479
    %495 = vmatpush.bf16.msra.mxu0 %v478
    %496 = vmatpush.bf16.msra.mxu0 %v477
    %497 = vmatpush.bf16.msra.mxu0 %v476
    %498 = vmatpush.bf16.msra.mxu0 %v475
    %499 = vmatmul.bf16.gmra.mxu0 %v422
    %v500 = vpop.f32.mrf.mxu0
    %v501 = vadd.f32 %v441, %v500
    %v502 = vpop.f32.mrf.mxu0
    %v503 = vadd.f32 %v441, %v502
    %504 = vdwg.mxu0
    %v505 = vmax.f32 %v501, 0.0
    %v506 = vmax.f32 %v503, 0.0
    %v507 = vpack.c.bf16 %v506, %v505
    %v508 = vld [vmem:[#allocation7] sm:$0xff]
    %v509 = vld [vmem:[#allocation7 + $0x8] sm:$0xff]
    %v510 = vld [vmem:[#allocation7 + $0x10] sm:$0xff]
    %v511 = vld [vmem:[#allocation7 + $0x18] sm:$0xff]
    %v512 = vld [vmem:[#allocation7 + $0x20] sm:$0xff]
    %v513 = vld [vmem:[#allocation7 + $0x28] sm:$0xff]
    %v514 = vld [vmem:[#allocation7 + $0x30] sm:$0xff]
    %v515 = vld [vmem:[#allocation7 + $0x38] sm:$0xff]
    %v516 = vld [vmem:[#allocation7 + $0x40] sm:$0xff]
    %v517 = vld [vmem:[#allocation7 + $0x48] sm:$0xff]
    %v518 = vld [vmem:[#allocation7 + $0x50] sm:$0xff]
    %v519 = vld [vmem:[#allocation7 + $0x58] sm:$0xff]
    %v520 = vld [vmem:[#allocation7 + $0x60] sm:$0xff]
    %v521 = vld [vmem:[#allocation7 + $0x68] sm:$0xff]
    %v522 = vld [vmem:[#allocation7 + $0x70] sm:$0xff]
    %v523 = vld [vmem:[#allocation7 + $0x78] sm:$0xff]
    %v524 = vld [vmem:[%s8] sm:$0x3]
    %v526 = vperm.slane %v524, 0
    %v527 = vperm.slane %v524, 1
    %v546 = vunpack.c.l.b16 %v508
    %v547 = vunpack.c.h.b16 %v508
    %v548 = vunpack.c.l.b16 %v509
    %v549 = vunpack.c.h.b16 %v509
    %v550 = vunpack.c.l.b16 %v510
    %v551 = vunpack.c.h.b16 %v510
    %v552 = vunpack.c.l.b16 %v511
    %v553 = vunpack.c.h.b16 %v511
    %v554 = vunpack.c.l.b16 %v512
    %v555 = vunpack.c.h.b16 %v512
    %v556 = vunpack.c.l.b16 %v513
    %v557 = vunpack.c.h.b16 %v513
    %v558 = vunpack.c.l.b16 %v514
    %v559 = vunpack.c.h.b16 %v514
    %v560 = vunpack.c.l.b16 %v515
    %v561 = vunpack.c.h.b16 %v515
    %v562 = vunpack.c.l.b16 %v516
    %v563 = vunpack.c.h.b16 %v516
    %v564 = vunpack.c.l.b16 %v517
    %v565 = vunpack.c.h.b16 %v517
    %v566 = vunpack.c.l.b16 %v518
    %v567 = vunpack.c.h.b16 %v518
    %v568 = vunpack.c.l.b16 %v519
    %v569 = vunpack.c.h.b16 %v519
    %v570 = vunpack.c.l.b16 %v520
    %v571 = vunpack.c.h.b16 %v520
    %v572 = vunpack.c.l.b16 %v521
    %v573 = vunpack.c.h.b16 %v521
    %v574 = vunpack.c.l.b16 %v522
    %v575 = vunpack.c.h.b16 %v522
    %v576 = vunpack.c.l.b16 %v523
    %v577 = vunpack.c.h.b16 %v523
    %v578 = vpack.c.b16 %v548, %v546
    %v579 = vpack.c.b16 %v549, %v547
    %v580 = vpack.c.b16 %v552, %v550
    %v581 = vpack.c.b16 %v553, %v551
    %v582 = vpack.c.b16 %v556, %v554
    %v583 = vpack.c.b16 %v557, %v555
    %v584 = vpack.c.b16 %v560, %v558
    %v585 = vpack.c.b16 %v561, %v559
    %v586 = vpack.c.b16 %v564, %v562
    %v587 = vpack.c.b16 %v565, %v563
    %v588 = vpack.c.b16 %v568, %v566
    %v589 = vpack.c.b16 %v569, %v567
    %v590 = vpack.c.b16 %v572, %v570
    %v591 = vpack.c.b16 %v573, %v571
    %v592 = vpack.c.b16 %v576, %v574
    %v593 = vpack.c.b16 %v577, %v575
    %610 = vmatpush.bf16.msra.mxu0 %v592
    %611 = vmatpush.bf16.msra.mxu0 %v590
    %612 = vmatpush.bf16.msra.mxu0 %v588
    %613 = vmatpush.bf16.msra.mxu0 %v586
    %614 = vmatpush.bf16.msra.mxu0 %v584
    %615 = vmatpush.bf16.msra.mxu0 %v582
    %616 = vmatpush.bf16.msra.mxu0 %v580
    %617 = vmatpush.bf16.msra.mxu0 %v578
    %618 = vmatmul.bf16.gmra.mxu0 %v507
    %v619 = vpop.f32.mrf.mxu0
    %v620 = vadd.f32 %v526, %v619
    %v621 = vpop.f32.mrf.mxu0
    %v622 = vadd.f32 %v526, %v621
    %623 = vdwg.mxu0
    %624 = vmatpush.bf16.msra.mxu0 %v593
    %625 = vmatpush.bf16.msra.mxu0 %v591
    %626 = vmatpush.bf16.msra.mxu0 %v589
    %627 = vmatpush.bf16.msra.mxu0 %v587
    %628 = vmatpush.bf16.msra.mxu0 %v585
    %629 = vmatpush.bf16.msra.mxu0 %v583
    %630 = vmatpush.bf16.msra.mxu0 %v581
    %631 = vmatpush.bf16.msra.mxu0 %v579
    %632 = vmatmul.bf16.gmra.mxu0 %v507
    %v633 = vpop.f32.mrf.mxu0
    %v634 = vadd.f32 %v527, %v633
    %v635 = vpop.f32.mrf.mxu0
    %v636 = vadd.f32 %v527, %v635
    %637 = vdwg.mxu0
    %v638 = vmax.f32 %v620, 0.0
    %v639 = vmax.f32 %v634, 0.0
    %v640 = vmax.f32 %v622, 0.0
    %v641 = vmax.f32 %v636, 0.0
    %v642 = vpack.c.bf16 %v640, %v638
    %v643 = vpack.c.bf16 %v641, %v639
    %v644 = vld [vmem:[#allocation9] sm:$0xf]
    %v645 = vld [vmem:[#allocation9 + $0x4] sm:$0xf]
    %v646 = vld [vmem:[#allocation9 + $0x8] sm:$0xf]
    %v647 = vld [vmem:[#allocation9 + $0xc] sm:$0xf]
    %v648 = vld [vmem:[#allocation9 + $0x10] sm:$0xf]
    %v649 = vld [vmem:[#allocation9 + $0x14] sm:$0xf]
    %v650 = vld [vmem:[#allocation9 + $0x18] sm:$0xf]
    %v651 = vld [vmem:[#allocation9 + $0x1c] sm:$0xf]
    %v652 = vld [vmem:[#allocation9 + $0x20] sm:$0xf]
    %v653 = vld [vmem:[#allocation9 + $0x24] sm:$0xf]
    %v654 = vld [vmem:[#allocation9 + $0x28] sm:$0xf]
    %v655 = vld [vmem:[#allocation9 + $0x2c] sm:$0xf]
    %v656 = vld [vmem:[#allocation9 + $0x30] sm:$0xf]
    %v657 = vld [vmem:[#allocation9 + $0x34] sm:$0xf]
    %v658 = vld [vmem:[#allocation9 + $0x38] sm:$0xf]
    %v659 = vld [vmem:[#allocation9 + $0x3c] sm:$0xf]
    %v660 = vld [vmem:[#allocation9 + $0x40] sm:$0xf]
    %v661 = vld [vmem:[#allocation9 + $0x44] sm:$0xf]
    %v662 = vld [vmem:[#allocation9 + $0x48] sm:$0xf]
    %v663 = vld [vmem:[#allocation9 + $0x4c] sm:$0xf]
    %v664 = vld [vmem:[#allocation9 + $0x50] sm:$0xf]
    %v665 = vld [vmem:[#allocation9 + $0x54] sm:$0xf]
    %v666 = vld [vmem:[#allocation9 + $0x58] sm:$0xf]
    %v667 = vld [vmem:[#allocation9 + $0x5c] sm:$0xf]
    %v668 = vld [vmem:[#allocation9 + $0x60] sm:$0xf]
    %v669 = vld [vmem:[#allocation9 + $0x64] sm:$0xf]
    %v670 = vld [vmem:[#allocation9 + $0x68] sm:$0xf]
    %v671 = vld [vmem:[#allocation9 + $0x6c] sm:$0xf]
    %v672 = vld [vmem:[#allocation9 + $0x70] sm:$0xf]
    %v673 = vld [vmem:[#allocation9 + $0x74] sm:$0xf]
    %v674 = vld [vmem:[#allocation9 + $0x78] sm:$0xf]
    %v675 = vld [vmem:[#allocation9 + $0x7c] sm:$0xf]
    %v676 = vld [vmem:[%s10] sm:$0x1]
    %v678 = vperm.slane %v676, 0
    %v712 = vunpack.c.l.b16 %v644
    %v713 = vunpack.c.l.b16 %v645
    %v714 = vunpack.c.l.b16 %v646
    %v715 = vunpack.c.l.b16 %v647
    %v716 = vunpack.c.l.b16 %v648
    %v717 = vunpack.c.l.b16 %v649
    %v718 = vunpack.c.l.b16 %v650
    %v719 = vunpack.c.l.b16 %v651
    %v720 = vunpack.c.l.b16 %v652
    %v721 = vunpack.c.l.b16 %v653
    %v722 = vunpack.c.l.b16 %v654
    %v723 = vunpack.c.l.b16 %v655
    %v724 = vunpack.c.l.b16 %v656
    %v725 = vunpack.c.l.b16 %v657
    %v726 = vunpack.c.l.b16 %v658
    %v727 = vunpack.c.l.b16 %v659
    %v728 = vunpack.c.l.b16 %v660
    %v729 = vunpack.c.l.b16 %v661
    %v730 = vunpack.c.l.b16 %v662
    %v731 = vunpack.c.l.b16 %v663
    %v732 = vunpack.c.l.b16 %v664
    %v733 = vunpack.c.l.b16 %v665
    %v734 = vunpack.c.l.b16 %v666
    %v735 = vunpack.c.l.b16 %v667
    %v736 = vunpack.c.l.b16 %v668
    %v737 = vunpack.c.l.b16 %v669
    %v738 = vunpack.c.l.b16 %v670
    %v739 = vunpack.c.l.b16 %v671
    %v740 = vunpack.c.l.b16 %v672
    %v741 = vunpack.c.l.b16 %v673
    %v742 = vunpack.c.l.b16 %v674
    %v743 = vunpack.c.l.b16 %v675
    %v744 = vpack.c.b16 %v713, %v712
    %v745 = vpack.c.b16 %v715, %v714
    %v746 = vpack.c.b16 %v717, %v716
    %v747 = vpack.c.b16 %v719, %v718
    %v748 = vpack.c.b16 %v721, %v720
    %v749 = vpack.c.b16 %v723, %v722
    %v750 = vpack.c.b16 %v725, %v724
    %v751 = vpack.c.b16 %v727, %v726
    %v752 = vpack.c.b16 %v729, %v728
    %v753 = vpack.c.b16 %v731, %v730
    %v754 = vpack.c.b16 %v733, %v732
    %v755 = vpack.c.b16 %v735, %v734
    %v756 = vpack.c.b16 %v737, %v736
    %v757 = vpack.c.b16 %v739, %v738
    %v758 = vpack.c.b16 %v741, %v740
    %v759 = vpack.c.b16 %v743, %v742
    %776 = vmatpush.bf16.msra.mxu0 %v751
    %777 = vmatpush.bf16.msra.mxu0 %v750
    %778 = vmatpush.bf16.msra.mxu0 %v749
    %779 = vmatpush.bf16.msra.mxu0 %v748
    %780 = vmatpush.bf16.msra.mxu0 %v747
    %781 = vmatpush.bf16.msra.mxu0 %v746
    %782 = vmatpush.bf16.msra.mxu0 %v745
    %783 = vmatpush.bf16.msra.mxu0 %v744
    %784 = vmatmul.bf16.gmra.mxu0 %v642
    %v785 = vpop.f32.mrf.mxu0
    %v786 = vadd.f32 %v678, %v785
    %v787 = vpop.f32.mrf.mxu0
    %v788 = vadd.f32 %v678, %v787
    %789 = vdwg.mxu0
    %790 = vmatpush.bf16.msra.mxu0 %v759
    %791 = vmatpush.bf16.msra.mxu0 %v758
    %792 = vmatpush.bf16.msra.mxu0 %v757
    %793 = vmatpush.bf16.msra.mxu0 %v756
    %794 = vmatpush.bf16.msra.mxu0 %v755
    %795 = vmatpush.bf16.msra.mxu0 %v754
    %796 = vmatpush.bf16.msra.mxu0 %v753
    %797 = vmatpush.bf16.msra.mxu0 %v752
    %798 = vmatmul.bf16.gmra.mxu0 %v643
    %v799 = vpop.f32.mrf.mxu0
    %v800 = vadd.f32 %v786, %v799
    %v801 = vpop.f32.mrf.mxu0
    %v802 = vadd.f32 %v788, %v801
    %803 = vdwg.mxu0
    %804 = vst [vmem:[%s11] sm:$0xff] %v800
    %805 = vst [vmem:[%s11 + $0x8] sm:$0xff] %v802
    // Predicated region
    $region66: #{ae_forward.1} parent=1 // pred_check
      _
    $region67: #{ae_forward.1} parent=1 // pred_check_branch
      %807 = sbr.rel (0) target = $region69
    $region68: #{ae_forward.1} parent=1 // pred_region
      _
    $region69: #{ae_forward.1} parent=1 // pred_fallthru
      _
    // Predicated region
    $region70: #{ae_forward.1} parent=1 // pred_check
      _
    $region71: #{ae_forward.1} parent=1 // pred_check_branch
      %809 = sbr.rel (0) target = $region73
    $region72: #{ae_forward.1} parent=1 // pred_region
      _
    $region73: #{ae_forward.1} parent=1 // pred_fallthru
      _
    %810 = vsyncpa [#allocation3], 1
    %811 = vsyncpa [#allocation5], 1
    %812 = vsyncpa [#allocation8], 1

</llo_original>
